<compile_context>
chip_gen: v5e
topology: v5e:2x2
jax: 0.10.0
libtpu: 0.0.40
codegen_flags: <defaults>
</compile_context>

<pallas_src>
import numpy as np
import jax
import jax.numpy as jnp
from jax import lax
from jax.experimental import pallas as pl
from jax.experimental.pallas import tpu as pltpu


def space_attention_kernel(x_ref, wkqv_ref, bkqv_ref, wl_ref, bl_ref, out_ref):
    """One batch element per grid step (channel-first layout).

    x_ref    : (1, C_in, HW)       input, channel-first (lane dim = HW, dense)
    wkqv_ref : (3*C_out, C_in)     stacked K/Q/V 1x1 conv weights
    bkqv_ref : (3*C_out, 1)        stacked K/Q/V biases (broadcast along HW)
    wl_ref   : (C_in, C_out)       local_weight 1x1 conv weight
    bl_ref   : (C_in, 1)           local_weight bias
    out_ref  : (1, C_in, HW)       output = x + local_weight(attention(x))
    """
    x = x_ref[0]                                                 # (C_in, HW) f32
    C_out = wl_ref.shape[1]
    HW = x.shape[1]

    # Fused K/Q/V 1x1 convs: one MXU push + one stacked bias add.
    KQV = jnp.dot(wkqv_ref[...], x,
                  preferred_element_type=jnp.float32) + bkqv_ref[...]  # (3C_out, HW)
    K = KQV[0 * C_out:1 * C_out]                                 # (C_out, HW)
    Q = KQV[1 * C_out:2 * C_out]                                 # (C_out, HW)
    V = KQV[2 * C_out:3 * C_out]                                 # (C_out, HW)

    # KQ[i, j] = sum_c K[c, i] * Q[c, j]  (torch: K_reshape @ Q_reshape).
    # Contract the leading channel axis of both operands -> no explicit .T.
    KQ = lax.dot_general(K, Q, dimension_numbers=(((0,), (0,)), ((), ())),
                         preferred_element_type=jnp.float32)     # (HW, HW)

    # Numerically-stable exponentials; normalization deferred past PV matmul.
    m = jnp.max(KQ, axis=-1, keepdims=True)                      # (HW, 1)
    p = jnp.exp(KQ - m).astype(jnp.bfloat16)                     # (HW, HW) bf16

    # Ones-row trick: row C_out of the PV result is the softmax denominator.
    V_aug = jnp.concatenate(
        [V.astype(jnp.bfloat16), jnp.ones((1, HW), jnp.bfloat16)], axis=0)
    # O_aug[c, i] = sum_j V_aug[c, j] * p[i, j]  (f32 accumulation on MXU)
    O_aug = lax.dot_general(V_aug, p,
                            dimension_numbers=(((1,), (1,)), ((), ())),
                            preferred_element_type=jnp.float32)  # (C_out+1, HW)
    inv_l = pl.reciprocal(O_aug[C_out:C_out + 1])                # (1, HW), exact
    O = O_aug[:C_out] * inv_l                                    # (C_out, HW)

    # local_weight 1x1 conv back to C_in, plus residual.
    W = jnp.dot(wl_ref[...], O,
                preferred_element_type=jnp.float32) + bl_ref[...]  # (C_in, HW)
    out_ref[0] = x + W


def space_attention_forward(x_nchw, params):
    """x_nchw: (B, C_in, H, W) float32. Returns (B, C_in, H, W)."""
    B, C_in, H, Wd = x_nchw.shape
    HW = H * Wd
    C_out = params["wk"].shape[0]

    # NCHW -> (B, C_in, HW): a free reshape (channel-first, no transpose).
    x_cf = x_nchw.reshape(B, C_in, HW)

    # Stack the three 1x1 conv weights/biases so the kernel does ONE matmul.
    wkqv = jnp.concatenate([params["wk"].reshape(C_out, C_in),
                            params["wq"].reshape(C_out, C_in),
                            params["wv"].reshape(C_out, C_in)], axis=0)   # (3C_out, C_in)
    bkqv = jnp.concatenate([params["bk"], params["bq"],
                            params["bv"]]).reshape(3 * C_out, 1)          # (3C_out, 1)
    wl = params["wl"].reshape(C_in, C_out)
    bl = params["bl"].reshape(C_in, 1)

    full = lambda a: pl.BlockSpec(a.shape, lambda b: tuple(0 for _ in a.shape))

    out_cf = pl.pallas_call(
        space_attention_kernel,
        out_shape=jax.ShapeDtypeStruct((B, C_in, HW), jnp.float32),
        grid_spec=pltpu.PrefetchScalarGridSpec(
            num_scalar_prefetch=0,
            grid=(B,),
            in_specs=[
                pl.BlockSpec((1, C_in, HW), lambda b: (b, 0, 0)),   # x
                full(wkqv), full(bkqv), full(wl), full(bl),
            ],
            out_specs=pl.BlockSpec((1, C_in, HW), lambda b: (b, 0, 0)),
        ),
        compiler_params=pltpu.CompilerParams(
            dimension_semantics=("parallel",)),
    )(x_cf, wkqv, bkqv, wl, bl)

    # (B, C_in, HW) -> NCHW: free reshape.
    return out_cf.reshape(B, C_in, H, Wd)


def reference_forward(x_nchw, params):
    """Pure-JAX f32 reference mirroring the PyTorch forward (1x1 convs, stride 1)."""
    B, C_in, H, Wd = x_nchw.shape
    HW = H * Wd
    C_out = params["wk"].shape[0]
    x_cl = jnp.transpose(x_nchw.reshape(B, C_in, HW), (0, 2, 1))          # (B,HW,C_in)
    conv = lambda w, b: jnp.einsum("bsc,oc->bso", x_cl, w.reshape(C_out, C_in)) + b
    K = conv(params["wk"], params["bk"])
    Q = conv(params["wq"], params["bq"])
    V = conv(params["wv"], params["bv"])
    KQ = jnp.einsum("bic,bjc->bij", K, Q)
    attn = jax.nn.softmax(KQ, axis=-1)
    vec = jnp.einsum("bij,bjc->bic", attn, V)                             # (B,HW,C_out)
    Wout = jnp.einsum("bso,io->bsi", vec, params["wl"].reshape(C_in, C_out)) + params["bl"]
    out_cl = x_cl + Wout
    return jnp.transpose(out_cl, (0, 2, 1)).reshape(B, C_in, H, Wd)


if __name__ == "__main__":
    # Module config: input_size=4, output_size=8, kernel_size=1, stride=1,
    # padding=0, scale=2 (stride==1 so the pool branch is identity).
    B, C_in, C_out, H, Wd = 2, 4, 8, 16, 16

    key = jax.random.PRNGKey(0)
    keys = jax.random.split(key, 9)
    fan = 1.0 / np.sqrt(C_in)          # ~ PyTorch Conv2d default init scale
    fan_l = 1.0 / np.sqrt(C_out)
    params = {
        "wk": jax.random.uniform(keys[0], (C_out, C_in, 1, 1), jnp.float32, -fan, fan),
        "bk": jax.random.uniform(keys[1], (C_out,), jnp.float32, -fan, fan),
        "wq": jax.random.uniform(keys[2], (C_out, C_in, 1, 1), jnp.float32, -fan, fan),
        "bq": jax.random.uniform(keys[3], (C_out,), jnp.float32, -fan, fan),
        "wv": jax.random.uniform(keys[4], (C_out, C_in, 1, 1), jnp.float32, -fan, fan),
        "bv": jax.random.uniform(keys[5], (C_out,), jnp.float32, -fan, fan),
        "wl": jax.random.uniform(keys[6], (C_in, C_out, 1, 1), jnp.float32, -fan_l, fan_l),
        "bl": jax.random.uniform(keys[7], (C_in,), jnp.float32, -fan_l, fan_l),
    }
    x = jax.random.normal(keys[8], (B, C_in, H, Wd), jnp.float32)

    out = space_attention_forward(x, params)
    out = jax.block_until_ready(out)

    ref = jax.block_until_ready(reference_forward(x, params))
    assert out.shape == (B, C_in, H, Wd)
    # bf16 p/V operands in the PV matmul (f32 accumulation, exact reciprocal of
    # the MXU-computed denominator) give ~1e-3-level differences vs the f32
    # reference, hence the 2e-3 tolerance.
    np.testing.assert_allclose(np.asarray(out), np.asarray(ref), rtol=2e-3, atol=2e-3)

    print("KERNEL_OK")
</pallas_src>

<mosaic_0001>
module attributes {stable_mosaic.version = 11 : i64} {
  func.func @space_attention_kernel(%arg0: i32, %arg1: memref<1x4x256xf32, #tpu.memory_space<vmem>>, %arg2: memref<24x4xf32, #tpu.memory_space<vmem>>, %arg3: memref<24x1xf32, #tpu.memory_space<vmem>>, %arg4: memref<4x8xf32, #tpu.memory_space<vmem>>, %arg5: memref<4x1xf32, #tpu.memory_space<vmem>>, %arg6: memref<1x4x256xf32, #tpu.memory_space<vmem>>) attributes {dimension_semantics = [#tpu.dimension_semantics<parallel>], iteration_bounds = array<i64: 2>, scalar_prefetch = 0 : i64, scratch_operands = 0 : i64, tpu.core_type = #tpu.core_type<tc>, window_params = [{transform_indices = @transform_0, window_bounds = array<i64: 1, 4, 256>}, {pipeline_mode = #tpu.pipeline_mode<synchronous>, transform_indices = @transform_1, window_bounds = array<i64: 24, 4>}, {pipeline_mode = #tpu.pipeline_mode<synchronous>, transform_indices = @transform_2, window_bounds = array<i64: 24, 1>}, {pipeline_mode = #tpu.pipeline_mode<synchronous>, transform_indices = @transform_3, window_bounds = array<i64: 4, 8>}, {pipeline_mode = #tpu.pipeline_mode<synchronous>, transform_indices = @transform_4, window_bounds = array<i64: 4, 1>}, {transform_indices = @transform_5, window_bounds = array<i64: 1, 4, 256>}]} {
    %c0 = arith.constant 0 : index
    %c0_0 = arith.constant 0 : index
    %c0_1 = arith.constant 0 : index
    %0 = vector.load %arg1[%c0, %c0_0, %c0_1] : memref<1x4x256xf32, #tpu.memory_space<vmem>>, vector<1x4x256xf32>
    %1 = vector.shape_cast %0 : vector<1x4x256xf32> to vector<4x256xf32>
    %c0_2 = arith.constant 0 : index
    %c0_3 = arith.constant 0 : index
    %2 = vector.load %arg2[%c0_2, %c0_3] : memref<24x4xf32, #tpu.memory_space<vmem>>, vector<24x4xf32>
    %cst = arith.constant dense<0.000000e+00> : vector<24x256xf32>
    %3 = tpu.matmul %2, %1, %cst {dimension_numbers = #tpu.dot_dimension_numbers<[1], [0], [0], [1], [0, 0, 1, 1], [], []>} : vector<24x4xf32>, vector<4x256xf32>, vector<24x256xf32> -> vector<24x256xf32>
    %c0_4 = arith.constant 0 : index
    %c0_5 = arith.constant 0 : index
    %4 = vector.load %arg3[%c0_4, %c0_5] : memref<24x1xf32, #tpu.memory_space<vmem>>, vector<24x1xf32>
    %5 = vector.broadcast %4 : vector<24x1xf32> to vector<24x256xf32>
    %6 = arith.addf %3, %5 : vector<24x256xf32>
    %7 = vector.extract_strided_slice %6 {offsets = [0, 0], sizes = [8, 256], strides = [1, 1]} : vector<24x256xf32> to vector<8x256xf32>
    %8 = vector.extract_strided_slice %6 {offsets = [8, 0], sizes = [8, 256], strides = [1, 1]} : vector<24x256xf32> to vector<8x256xf32>
    %9 = vector.extract_strided_slice %6 {offsets = [16, 0], sizes = [8, 256], strides = [1, 1]} : vector<24x256xf32> to vector<8x256xf32>
    %cst_6 = arith.constant dense<0.000000e+00> : vector<256x256xf32>
    %10 = tpu.matmul %7, %8, %cst_6 {dimension_numbers = #tpu.dot_dimension_numbers<[0], [0], [1], [1], [0, 1, 1, 1], [], []>} : vector<8x256xf32>, vector<8x256xf32>, vector<256x256xf32> -> vector<256x256xf32>
    %cst_7 = arith.constant dense<0xFF800000> : vector<256xf32>
    %11 = vector.multi_reduction <maximumf>, %10, %cst_7 [1] : vector<256x256xf32> to vector<256xf32>
    %12 = vector.shape_cast %11 : vector<256xf32> to vector<256x1xf32>
    %13 = vector.broadcast %12 : vector<256x1xf32> to vector<256x256xf32>
    %14 = arith.subf %10, %13 : vector<256x256xf32>
    %15 = math.exp %14 : vector<256x256xf32>
    %16 = arith.truncf %15 : vector<256x256xf32> to vector<256x256xbf16>
    %17 = arith.truncf %9 : vector<8x256xf32> to vector<8x256xbf16>
    %cst_8 = arith.constant 1.000000e+00 : bf16
    %18 = vector.broadcast %cst_8 : bf16 to vector<1x256xbf16>
    %19 = tpu.concatenate %17, %18 in 0 : vector<8x256xbf16>, vector<1x256xbf16> -> vector<9x256xbf16>
    %cst_9 = arith.constant dense<0.000000e+00> : vector<9x256xf32>
    %20 = tpu.matmul %19, %16, %cst_9 {dimension_numbers = #tpu.dot_dimension_numbers<[1], [1], [0], [0], [0, 0, 1, 0], [], []>} : vector<9x256xbf16>, vector<256x256xbf16>, vector<9x256xf32> -> vector<9x256xf32>
    %21 = vector.extract_strided_slice %20 {offsets = [8, 0], sizes = [1, 256], strides = [1, 1]} : vector<9x256xf32> to vector<1x256xf32>
    %22 = tpu.reciprocal %21 : vector<1x256xf32> -> vector<1x256xf32>
    %23 = vector.extract_strided_slice %20 {offsets = [0, 0], sizes = [8, 256], strides = [1, 1]} : vector<9x256xf32> to vector<8x256xf32>
    %24 = vector.broadcast %22 : vector<1x256xf32> to vector<8x256xf32>
    %25 = arith.mulf %23, %24 : vector<8x256xf32>
    %c0_10 = arith.constant 0 : index
    %c0_11 = arith.constant 0 : index
    %26 = vector.load %arg4[%c0_10, %c0_11] : memref<4x8xf32, #tpu.memory_space<vmem>>, vector<4x8xf32>
    %cst_12 = arith.constant dense<0.000000e+00> : vector<4x256xf32>
    %27 = tpu.matmul %26, %25, %cst_12 {dimension_numbers = #tpu.dot_dimension_numbers<[1], [0], [0], [1], [0, 0, 1, 1], [], []>} : vector<4x8xf32>, vector<8x256xf32>, vector<4x256xf32> -> vector<4x256xf32>
    %c0_13 = arith.constant 0 : index
    %c0_14 = arith.constant 0 : index
    %28 = vector.load %arg5[%c0_13, %c0_14] : memref<4x1xf32, #tpu.memory_space<vmem>>, vector<4x1xf32>
    %29 = vector.broadcast %28 : vector<4x1xf32> to vector<4x256xf32>
    %30 = arith.addf %27, %29 : vector<4x256xf32>
    %31 = arith.addf %1, %30 : vector<4x256xf32>
    %c0_15 = arith.constant 0 : index
    %c0_16 = arith.constant 0 : index
    %c0_17 = arith.constant 0 : index
    %32 = vector.load %arg6[%c0_15, %c0_16, %c0_17] : memref<1x4x256xf32, #tpu.memory_space<vmem>>, vector<1x4x256xf32>
    %33 = vector.shape_cast %32 : vector<1x4x256xf32> to vector<4x256xf32>
    %34 = vector.shape_cast %31 : vector<4x256xf32> to vector<1x4x256xf32>
    tpu.vector_store %arg6[%c0_15, %c0_16, %c0_17], %34 {strides = array<i32>} : memref<1x4x256xf32, #tpu.memory_space<vmem>>, vector<1x4x256xf32>,
    return
  }
  func.func @transform_0(%arg0: i32) -> (i32, i32, i32) {
    %c0_i32 = arith.constant 0 : i32
    %c0_i32_0 = arith.constant 0 : i32
    %c0_i32_1 = arith.constant 0 : i32
    return %arg0, %c0_i32, %c0_i32_0 : i32, i32, i32
  }
  func.func @transform_1(%arg0: i32) -> (i32, i32) {
    %c0_i32 = arith.constant 0 : i32
    %c0_i32_0 = arith.constant 0 : i32
    %c0_i32_1 = arith.constant 0 : i32
    return %c0_i32, %c0_i32_0 : i32, i32
  }
  func.func @transform_2(%arg0: i32) -> (i32, i32) {
    %c0_i32 = arith.constant 0 : i32
    %c0_i32_0 = arith.constant 0 : i32
    %c0_i32_1 = arith.constant 0 : i32
    return %c0_i32, %c0_i32_0 : i32, i32
  }
  func.func @transform_3(%arg0: i32) -> (i32, i32) {
    %c0_i32 = arith.constant 0 : i32
    %c0_i32_0 = arith.constant 0 : i32
    %c0_i32_1 = arith.constant 0 : i32
    return %c0_i32, %c0_i32_0 : i32, i32
  }
  func.func @transform_4(%arg0: i32) -> (i32, i32) {
    %c0_i32 = arith.constant 0 : i32
    %c0_i32_0 = arith.constant 0 : i32
    %c0_i32_1 = arith.constant 0 : i32
    return %c0_i32, %c0_i32_0 : i32, i32
  }
  func.func @transform_5(%arg0: i32) -> (i32, i32, i32) {
    %c0_i32 = arith.constant 0 : i32
    %c0_i32_0 = arith.constant 0 : i32
    %c0_i32_1 = arith.constant 0 : i32
    return %arg0, %c0_i32, %c0_i32_0 : i32, i32, i32
  }
}

</mosaic_0001>

<llo_original>
// kernel: tpu_custom_call.1
$region0: #{tpu_custom_call.1}
  #allocation0 [shape = 'u32[]', space=smem, size = 0x4, offset = 0x4, fixed_abs, tag = 'smem constant byte address 0x4 - core index']
  #allocation1 [shape = 'u32[72,128]{1,0:T(1,128)}', space=vmem, size = 0x9000, scoped, tag = 'internal scratch']
  %s0 = inlined_call_operand.vmem [shape: f32[2,4,256], index: 0, kind: input, shape index: {}]
  %s1 = inlined_call_operand.vmem [shape: f32[24,4], index: 1, kind: input, shape index: {}]
  %s2 = inlined_call_operand.vmem [shape: f32[24,1], index: 2, kind: input, shape index: {}]
  %s3 = inlined_call_operand.vmem [shape: f32[4,8], index: 3, kind: input, shape index: {}]
  %s4 = inlined_call_operand.vmem [shape: f32[4,1], index: 4, kind: input, shape index: {}]
  %s5 = inlined_call_operand.hbm [shape: f32[2,4,256], index: 5, kind: output, shape index: {}]
  %s6 = sld [smem:[#allocation0]]
  $region53: #{tpu_custom_call.1} parent=0
    _
  %s8 = ssub.s32 1, %s6
  %s9 = scalar_select 0, %s8, %s6
  $region1: #{tpu_custom_call.1} parent=0
    #allocation2 [shape = 'u8[8192]{0}', space=vmem, size = 0x2000, scoped, tag = 'output window, operand 0']
    #allocation3 [shape = 's32[2]{0}', space=sflag, size = 0x8, scoped, tag = 'scoped memory for tpu_custom_call.1']
    %10 = vsyncpa [#allocation3], 0
    %s11 = scalar_lea.sflag [#allocation3], 1
    %12 = vsyncpa %s11, 0
    loop: start=0, step=1, limit=4
    $region2: #{tpu_custom_call.1} parent=1 // loop_pre_header
      _
    $region3: #{tpu_custom_call.1} parent=1 // loop_header
      %s14 = sphi 0, %s18
      %p15 = scmp.ge.s32.totalorder %s14, 4
      %s24 = sphi 0, %s26
      %s27 = sphi 0, %s24
      %s28 = sphi 0, %s27
      %s44 = sphi 0, %s28
      %s48 = sphi 0, %s48
      %s50 = sphi 0, %s48
      %s51 = sphi 0, %s50
      %s65 = sphi 0, %s51
      %s69 = sphi 0, %s69
      %s71 = sphi 0, %s69
      %s72 = sphi 0, %s71
      %s86 = sphi 0, %s72
      %s90 = sphi 0, %s90
      %s92 = sphi 0, %s90
      %s93 = sphi 0, %s92
      %s107 = sphi 0, %s93
      %s111 = sphi 0, %s111
      %s113 = sphi 0, %s111
      %s114 = sphi 0, %s113
      %s128 = sphi 0, %s114
      %s134 = sphi 0, %s136
      %s137 = sphi 0, %s134
      %s138 = sphi 0, %s137
      %s154 = sphi 0, %s138
    $region4: #{tpu_custom_call.1} parent=1 // loop_header_branch
      %17 = sbr.rel (%p15) target = $region8
    $region5: #{tpu_custom_call.1} parent=1 // loop_body
      %s19 = ssub.s32 %s14, 1
      %s20 = ssub.s32 %s14, 2
      %s21 = sadd.s32 %s14, 1
      %s22 = ssub.s32 %s14, %s21
      %p23 = scmp.eq.s32.totalorder %s22, 0
      %s25 = sadd.s32 %s24, 1
      %s26 = scalar_select %p23, %s24, %s25
      %p29 = pneg %p23
      %p30 = scmp.eq.s32.totalorder %s14, 1
      %p31 = por %p29, %p30
      %p32 = scmp.ne.s32.totalorder %s24, %s27
      %p33 = scmp.eq.s32.totalorder %s14, 0
      %p34 = por %p32, %p33
      %p35 = scmp.ne.s32.totalorder %s24, %s27
      %p36 = scmp.eq.s32.totalorder %s19, 1
      %p37 = por %p35, %p36
      %p38 = scmp.ne.s32.totalorder %s27, %s28
      %p39 = scmp.eq.s32.totalorder %s19, 0
      %p40 = por %p38, %p39
      %p41 = scmp.ne.s32.totalorder %s27, %s28
      %p42 = scmp.eq.s32.totalorder %s20, 1
      %p43 = por %p41, %p42
      %p45 = scmp.ne.s32.totalorder %s28, %s44
      %p46 = scmp.eq.s32.totalorder %s20, 0
      %p47 = por %p45, %p46
      %s49 = sadd.s32 %s48, 1
      %p52 = scmp.eq.s32.totalorder %s14, 1
      %p53 = scmp.ne.s32.totalorder %s48, %s50
      %p54 = scmp.eq.s32.totalorder %s14, 0
      %p55 = por %p53, %p54
      %p56 = scmp.ne.s32.totalorder %s48, %s50
      %p57 = scmp.eq.s32.totalorder %s19, 1
      %p58 = por %p56, %p57
      %p59 = scmp.ne.s32.totalorder %s50, %s51
      %p60 = scmp.eq.s32.totalorder %s19, 0
      %p61 = por %p59, %p60
      %p62 = scmp.ne.s32.totalorder %s50, %s51
      %p63 = scmp.eq.s32.totalorder %s20, 1
      %p64 = por %p62, %p63
      %p66 = scmp.ne.s32.totalorder %s51, %s65
      %p67 = scmp.eq.s32.totalorder %s20, 0
      %p68 = por %p66, %p67
      %s70 = sadd.s32 %s69, 1
      %p73 = scmp.eq.s32.totalorder %s14, 1
      %p74 = scmp.ne.s32.totalorder %s69, %s71
      %p75 = scmp.eq.s32.totalorder %s14, 0
      %p76 = por %p74, %p75
      %p77 = scmp.ne.s32.totalorder %s69, %s71
      %p78 = scmp.eq.s32.totalorder %s19, 1
      %p79 = por %p77, %p78
      %p80 = scmp.ne.s32.totalorder %s71, %s72
      %p81 = scmp.eq.s32.totalorder %s19, 0
      %p82 = por %p80, %p81
      %p83 = scmp.ne.s32.totalorder %s71, %s72
      %p84 = scmp.eq.s32.totalorder %s20, 1
      %p85 = por %p83, %p84
      %p87 = scmp.ne.s32.totalorder %s72, %s86
      %p88 = scmp.eq.s32.totalorder %s20, 0
      %p89 = por %p87, %p88
      %s91 = sadd.s32 %s90, 1
      %p94 = scmp.eq.s32.totalorder %s14, 1
      %p95 = scmp.ne.s32.totalorder %s90, %s92
      %p96 = scmp.eq.s32.totalorder %s14, 0
      %p97 = por %p95, %p96
      %p98 = scmp.ne.s32.totalorder %s90, %s92
      %p99 = scmp.eq.s32.totalorder %s19, 1
      %p100 = por %p98, %p99
      %p101 = scmp.ne.s32.totalorder %s92, %s93
      %p102 = scmp.eq.s32.totalorder %s19, 0
      %p103 = por %p101, %p102
      %p104 = scmp.ne.s32.totalorder %s92, %s93
      %p105 = scmp.eq.s32.totalorder %s20, 1
      %p106 = por %p104, %p105
      %p108 = scmp.ne.s32.totalorder %s93, %s107
      %p109 = scmp.eq.s32.totalorder %s20, 0
      %p110 = por %p108, %p109
      %s112 = sadd.s32 %s111, 1
      %p115 = scmp.eq.s32.totalorder %s14, 1
      %p116 = scmp.ne.s32.totalorder %s111, %s113
      %p117 = scmp.eq.s32.totalorder %s14, 0
      %p118 = por %p116, %p117
      %p119 = scmp.ne.s32.totalorder %s111, %s113
      %p120 = scmp.eq.s32.totalorder %s19, 1
      %p121 = por %p119, %p120
      %p122 = scmp.ne.s32.totalorder %s113, %s114
      %p123 = scmp.eq.s32.totalorder %s19, 0
      %p124 = por %p122, %p123
      %p125 = scmp.ne.s32.totalorder %s113, %s114
      %p126 = scmp.eq.s32.totalorder %s20, 1
      %p127 = por %p125, %p126
      %p129 = scmp.ne.s32.totalorder %s114, %s128
      %p130 = scmp.eq.s32.totalorder %s20, 0
      %p131 = por %p129, %p130
      %s132 = ssub.s32 %s14, %s21
      %p133 = scmp.eq.s32.totalorder %s132, 0
      %s135 = sadd.s32 %s134, 1
      %s136 = scalar_select %p133, %s134, %s135
      %p139 = pneg %p133
      %p140 = scmp.eq.s32.totalorder %s14, 1
      %p141 = por %p139, %p140
      %p142 = scmp.ne.s32.totalorder %s134, %s137
      %p143 = scmp.eq.s32.totalorder %s14, 0
      %p144 = por %p142, %p143
      %p145 = scmp.ne.s32.totalorder %s134, %s137
      %p146 = scmp.eq.s32.totalorder %s19, 1
      %p147 = por %p145, %p146
      %p148 = scmp.ne.s32.totalorder %s137, %s138
      %p149 = scmp.eq.s32.totalorder %s19, 0
      %p150 = por %p148, %p149
      %p151 = scmp.ne.s32.totalorder %s137, %s138
      %p152 = scmp.eq.s32.totalorder %s20, 1
      %p153 = por %p151, %p152
      %p155 = scmp.ne.s32.totalorder %s138, %s154
      %p156 = scmp.eq.s32.totalorder %s20, 0
      %p157 = por %p155, %p156
      %p158 = scmp.le.s32.totalorder 1, %s14
      %p159 = scmp.lt.s32.totalorder %s14, 3
      %p160 = pnand %p158, %p159
      %p161 = pneg %p160
      // Predicated region
      $region9: #{tpu_custom_call.1} parent=5 // pred_check
        _
      $region10: #{tpu_custom_call.1} parent=5 // pred_check_branch
        %163 = sbr.rel (%p160) target = $region12
      $region11: #{tpu_custom_call.1} parent=5 // pred_region
        %s164 = ssub.s32 %s14, 1
        // Predicated region
        $region13: #{tpu_custom_call.1} parent=11 // pred_check
          %p165 = pneg %p61
        $region14: #{tpu_custom_call.1} parent=11 // pred_check_branch
          %167 = sbr.rel (%p165) target = $region16
        $region15: #{tpu_custom_call.1} parent=11 // pred_region
          _
        $region16: #{tpu_custom_call.1} parent=11 // pred_fallthru
          _
        // Predicated region
        $region17: #{tpu_custom_call.1} parent=11 // pred_check
          %p168 = pneg %p82
        $region18: #{tpu_custom_call.1} parent=11 // pred_check_branch
          %170 = sbr.rel (%p168) target = $region20
        $region19: #{tpu_custom_call.1} parent=11 // pred_region
          _
        $region20: #{tpu_custom_call.1} parent=11 // pred_fallthru
          _
        // Predicated region
        $region21: #{tpu_custom_call.1} parent=11 // pred_check
          %p171 = pneg %p103
        $region22: #{tpu_custom_call.1} parent=11 // pred_check_branch
          %173 = sbr.rel (%p171) target = $region24
        $region23: #{tpu_custom_call.1} parent=11 // pred_region
          _
        $region24: #{tpu_custom_call.1} parent=11 // pred_fallthru
          _
        // Predicated region
        $region25: #{tpu_custom_call.1} parent=11 // pred_check
          %p174 = pneg %p124
        $region26: #{tpu_custom_call.1} parent=11 // pred_check_branch
          %176 = sbr.rel (%p174) target = $region28
        $region27: #{tpu_custom_call.1} parent=11 // pred_region
          _
        $region28: #{tpu_custom_call.1} parent=11 // pred_fallthru
          _
      $region12: #{tpu_custom_call.1} parent=5 // pred_fallthru
        _
      %p177 = scmp.lt.s32.totalorder %s14, 2
      // Predicated region
      $region29: #{tpu_custom_call.1} parent=5 // pred_check
        %p178 = pneg %p177
      $region30: #{tpu_custom_call.1} parent=5 // pred_check_branch
        %180 = sbr.rel (%p178) target = $region32
      $region31: #{tpu_custom_call.1} parent=5 // pred_region
        // Predicated region
        $region33: #{tpu_custom_call.1} parent=31 // pred_check
          %p181 = pneg %p34
        $region34: #{tpu_custom_call.1} parent=31 // pred_check_branch
          %183 = sbr.rel (%p181) target = $region36
        $region35: #{tpu_custom_call.1} parent=31 // pred_region
          %p184 = scmp.lt.s32.totalorder %s14, 1
          %s185 = scalar_select %p184, %s14, 1
          %s186 = smul.addr %s185, 2
          %s187 = smul.addr %s186, 4
          %s188 = scalar_lea.vmem %s0, %s187
        $region36: #{tpu_custom_call.1} parent=31 // pred_fallthru
          _
      $region32: #{tpu_custom_call.1} parent=5 // pred_fallthru
        _
      %p189 = scmp.le.s32.totalorder 1, %s14
      %p190 = scmp.lt.s32.totalorder %s14, 3
      %p191 = pnand %p189, %p190
      %p192 = pneg %p191
      // Predicated region
      $region37: #{tpu_custom_call.1} parent=5 // pred_check
        _
      $region38: #{tpu_custom_call.1} parent=5 // pred_check_branch
        %194 = sbr.rel (%p191) target = $region40
      $region39: #{tpu_custom_call.1} parent=5 // pred_region
        %s195 = ssub.s32 %s14, 1
        %p196 = scmp.lt.s32.totalorder %s19, 1
        %s197 = scalar_select %p196, %s19, 1
        %s198 = smul.addr %s197, 2
        %s199 = smul.addr %s198, 4
        %s200 = scalar_lea.vmem %s0, %s199
        %p201 = pneg %p40
        %p202 = pneg %p37
        %p203 = pneg %p61
        %p204 = pneg %p58
        %p205 = pneg %p82
        %p206 = pneg %p79
        %p207 = pneg %p103
        %p208 = pneg %p100
        %p209 = pneg %p124
        %p210 = pneg %p121
        %p211 = pneg %p150
        %p212 = pneg %p147
        %s213 = sand.u32 %s137, 1
        %s214 = scalar_lea.sflag [#allocation3], %s213
        %s215 = sand.u32 %s137, 1
        %s216 = smul.addr %s215, 8
        %s217 = scalar_lea.vmem [#allocation2], %s216
        %p218 = scmp.lt.s32.totalorder %s19, 1
        %s219 = scalar_select %p218, %s19, 1
        %s220 = smul.addr %s219, 2
        %s221 = smul.addr %s220, 4
        %s222 = scalar_lea.vmem %s0, %s221
        %v224 = vld [vmem:[%s222] sm:$0xff]
        %v225 = vld [vmem:[%s1] sm:$0xff]
        %v226 = vld [vmem:[%s1 + $0x8] sm:$0xff]
        %v227 = vld [vmem:[%s1 + $0x10] sm:$0xff]
        %v228 = vld [vmem:[%s2] sm:$0xff]
        %v229 = vld [vmem:[%s2 + $0x8] sm:$0xff]
        %v230 = vld [vmem:[%s2 + $0x10] sm:$0xff]
        %232 = vset.pattern.permute.xlu0 0
        %233 = vperm.xlu0 %232, %v228
        %v234 = vpop.permute.xlu0 %233
        %237 = vset.pattern.permute.xlu0 0
        %238 = vperm.xlu0 %237, %v229
        %v239 = vpop.permute.xlu0 %238
        %242 = vset.pattern.permute.xlu0 0
        %243 = vperm.xlu0 %242, %v230
        %v244 = vpop.permute.xlu0 %243
        %247 = vst [vmem:[#allocation1] ss:$2 sm:$0xff] %v224
        %v248 = vld.sshfl [vmem:[#allocation1] sm:$0xff pattern:$0x75316420]
        %v249 = vld.sshfl [vmem:[#allocation1 + $0x8] sm:$0xff pattern:$0x75316420]
        %vm250 = vcmask 31744
        %v252 = vsel %vm250, %v225, 0
        %v255 = vsel %vm250, %v226, 0
        %v258 = vsel %vm250, %v227, 0
        %vm260 = vcmask 1043456
        %v261 = vsel %vm260, %v248, 0
        %v263 = vsel %vm260, %v249, 0
        %265 = vmatpush.msra.mxu0 0.0
        %266 = vmatpush.msra.mxu0 0.0
        %267 = vmatpush.msra.mxu0 0.0
        %268 = vmatpush.msra.mxu0 0.0
        %269 = vmatpush.msra.mxu0 0.0
        %270 = vmatpush.msra.mxu0 0.0
        %271 = vmatpush.msra.mxu0 0.0
        %272 = vmatpush.msra.mxu0 0.0
        %273 = vmatpush.msra.mxu0 0.0
        %274 = vmatpush.msra.mxu0 0.0
        %275 = vmatpush.msra.mxu0 0.0
        %276 = vmatpush.msra.mxu0 0.0
        %277 = vmatpush.msra.mxu0 0.0
        %278 = vmatpush.msra.mxu0 0.0
        %279 = vmatpush.msra.mxu0 0.0
        %280 = vmatpush.msra.mxu0 %v261
        %281 = vmatmul.f32.gmra.mxu0 %v252
        %v282 = vpop.f32.mrf.mxu0
        %v283 = vadd.f32 %v234, %v282
        %284 = vmatmul.f32.gmra.mxu0 %v255
        %v285 = vpop.f32.mrf.mxu0
        %v286 = vadd.f32 %v239, %v285
        %287 = vmatmul.f32.gmra.mxu0 %v258
        %v288 = vpop.f32.mrf.mxu0
        %v289 = vadd.f32 %v244, %v288
        %290 = vdwg.mxu0
        %291 = vmatpush.msra.mxu0 0.0
        %292 = vmatpush.msra.mxu0 0.0
        %293 = vmatpush.msra.mxu0 0.0
        %294 = vmatpush.msra.mxu0 0.0
        %295 = vmatpush.msra.mxu0 0.0
        %296 = vmatpush.msra.mxu0 0.0
        %297 = vmatpush.msra.mxu0 0.0
        %298 = vmatpush.msra.mxu0 0.0
        %299 = vmatpush.msra.mxu0 0.0
        %300 = vmatpush.msra.mxu0 0.0
        %301 = vmatpush.msra.mxu0 0.0
        %302 = vmatpush.msra.mxu0 0.0
        %303 = vmatpush.msra.mxu0 0.0
        %304 = vmatpush.msra.mxu0 0.0
        %305 = vmatpush.msra.mxu0 0.0
        %306 = vmatpush.msra.mxu0 %v263
        %307 = vmatmul.f32.gmra.mxu0 %v252
        %v308 = vpop.f32.mrf.mxu0
        %v309 = vadd.f32 %v234, %v308
        %310 = vmatmul.f32.gmra.mxu0 %v255
        %v311 = vpop.f32.mrf.mxu0
        %v312 = vadd.f32 %v239, %v311
        %313 = vmatmul.f32.gmra.mxu0 %v258
        %v314 = vpop.f32.mrf.mxu0
        %v315 = vadd.f32 %v244, %v314
        %316 = vdwg.mxu0
        %317 = vxpose.xlu0.b32.start [1/16] %v283, 128
        %318 = vxpose.xlu0.b32.cont [2/16] 0.0, 128
        %319 = vxpose.xlu0.b32.cont [3/16] 0.0, 128
        %320 = vxpose.xlu0.b32.cont [4/16] 0.0, 128
        %321 = vxpose.xlu0.b32.cont [5/16] 0.0, 128
        %322 = vxpose.xlu0.b32.cont [6/16] 0.0, 128
        %323 = vxpose.xlu0.b32.cont [7/16] 0.0, 128
        %324 = vxpose.xlu0.b32.cont [8/16] 0.0, 128
        %325 = vxpose.xlu0.b32.cont [9/16] 0.0, 128
        %326 = vxpose.xlu0.b32.cont [10/16] 0.0, 128
        %327 = vxpose.xlu0.b32.cont [11/16] 0.0, 128
        %328 = vxpose.xlu0.b32.cont [12/16] 0.0, 128
        %329 = vxpose.xlu0.b32.cont [13/16] 0.0, 128
        %330 = vxpose.xlu0.b32.cont [14/16] 0.0, 128
        %331 = vxpose.xlu0.b32.cont [15/16] 0.0, 128
        %332 = vxpose.xlu0.b32.end [16/16] 0.0, 128
        %v333 = vpop.trf.xlu0
        %v334 = vpop.trf.xlu0
        %v335 = vpop.trf.xlu0
        %v336 = vpop.trf.xlu0
        %v337 = vpop.trf.xlu0
        %v338 = vpop.trf.xlu0
        %v339 = vpop.trf.xlu0
        %v340 = vpop.trf.xlu0
        %v341 = vpop.trf.xlu0
        %v342 = vpop.trf.xlu0
        %v343 = vpop.trf.xlu0
        %v344 = vpop.trf.xlu0
        %v345 = vpop.trf.xlu0
        %v346 = vpop.trf.xlu0
        %v347 = vpop.trf.xlu0
        %v348 = vpop.trf.xlu0
        %349 = vxpose.xlu0.b32.start [1/16] %v309, 128
        %350 = vxpose.xlu0.b32.cont [2/16] 0.0, 128
        %351 = vxpose.xlu0.b32.cont [3/16] 0.0, 128
        %352 = vxpose.xlu0.b32.cont [4/16] 0.0, 128
        %353 = vxpose.xlu0.b32.cont [5/16] 0.0, 128
        %354 = vxpose.xlu0.b32.cont [6/16] 0.0, 128
        %355 = vxpose.xlu0.b32.cont [7/16] 0.0, 128
        %356 = vxpose.xlu0.b32.cont [8/16] 0.0, 128
        %357 = vxpose.xlu0.b32.cont [9/16] 0.0, 128
        %358 = vxpose.xlu0.b32.cont [10/16] 0.0, 128
        %359 = vxpose.xlu0.b32.cont [11/16] 0.0, 128
        %360 = vxpose.xlu0.b32.cont [12/16] 0.0, 128
        %361 = vxpose.xlu0.b32.cont [13/16] 0.0, 128
        %362 = vxpose.xlu0.b32.cont [14/16] 0.0, 128
        %363 = vxpose.xlu0.b32.cont [15/16] 0.0, 128
        %364 = vxpose.xlu0.b32.end [16/16] 0.0, 128
        %v365 = vpop.trf.xlu0
        %v366 = vpop.trf.xlu0
        %v367 = vpop.trf.xlu0
        %v368 = vpop.trf.xlu0
        %v369 = vpop.trf.xlu0
        %v370 = vpop.trf.xlu0
        %v371 = vpop.trf.xlu0
        %v372 = vpop.trf.xlu0
        %v373 = vpop.trf.xlu0
        %v374 = vpop.trf.xlu0
        %v375 = vpop.trf.xlu0
        %v376 = vpop.trf.xlu0
        %v377 = vpop.trf.xlu0
        %v378 = vpop.trf.xlu0
        %v379 = vpop.trf.xlu0
        %v380 = vpop.trf.xlu0
        %vm381 = vcmask 64512
        %v383 = vsel %vm381, %v333, 0
        %v386 = vsel %vm381, %v334, 0
        %v389 = vsel %vm381, %v335, 0
        %v392 = vsel %vm381, %v336, 0
        %v395 = vsel %vm381, %v337, 0
        %v398 = vsel %vm381, %v338, 0
        %v401 = vsel %vm381, %v339, 0
        %v404 = vsel %vm381, %v340, 0
        %v407 = vsel %vm381, %v341, 0
        %v410 = vsel %vm381, %v342, 0
        %v413 = vsel %vm381, %v343, 0
        %v416 = vsel %vm381, %v344, 0
        %v419 = vsel %vm381, %v345, 0
        %v422 = vsel %vm381, %v346, 0
        %v425 = vsel %vm381, %v347, 0
        %v428 = vsel %vm381, %v348, 0
        %v431 = vsel %vm381, %v365, 0
        %v434 = vsel %vm381, %v366, 0
        %v437 = vsel %vm381, %v367, 0
        %v440 = vsel %vm381, %v368, 0
        %v443 = vsel %vm381, %v369, 0
        %v446 = vsel %vm381, %v370, 0
        %v449 = vsel %vm381, %v371, 0
        %v452 = vsel %vm381, %v372, 0
        %v455 = vsel %vm381, %v373, 0
        %v458 = vsel %vm381, %v374, 0
        %v461 = vsel %vm381, %v375, 0
        %v464 = vsel %vm381, %v376, 0
        %v467 = vsel %vm381, %v377, 0
        %v470 = vsel %vm381, %v378, 0
        %v473 = vsel %vm381, %v379, 0
        %v476 = vsel %vm381, %v380, 0
        %478 = vmatpush.msra.mxu0 0.0
        %479 = vmatpush.msra.mxu0 0.0
        %480 = vmatpush.msra.mxu0 0.0
        %481 = vmatpush.msra.mxu0 0.0
        %482 = vmatpush.msra.mxu0 0.0
        %483 = vmatpush.msra.mxu0 0.0
        %484 = vmatpush.msra.mxu0 0.0
        %485 = vmatpush.msra.mxu0 0.0
        %486 = vmatpush.msra.mxu0 0.0
        %487 = vmatpush.msra.mxu0 0.0
        %488 = vmatpush.msra.mxu0 0.0
        %489 = vmatpush.msra.mxu0 0.0
        %490 = vmatpush.msra.mxu0 0.0
        %491 = vmatpush.msra.mxu0 0.0
        %492 = vmatpush.msra.mxu0 0.0
        %493 = vmatpush.msra.mxu0 %v286
        %494 = vmatmul.f32.gmra.mxu0 %v383
        %v495 = vpop.f32.mrf.mxu0
        %v496 = vadd.f32 0.0, %v495
        %497 = vmatmul.f32.gmra.mxu0 %v386
        %v498 = vpop.f32.mrf.mxu0
        %v499 = vadd.f32 0.0, %v498
        %500 = vmatmul.f32.gmra.mxu0 %v389
        %v501 = vpop.f32.mrf.mxu0
        %v502 = vadd.f32 0.0, %v501
        %503 = vmatmul.f32.gmra.mxu0 %v392
        %v504 = vpop.f32.mrf.mxu0
        %v505 = vadd.f32 0.0, %v504
        %506 = vmatmul.f32.gmra.mxu0 %v395
        %v507 = vpop.f32.mrf.mxu0
        %v508 = vadd.f32 0.0, %v507
        %509 = vmatmul.f32.gmra.mxu0 %v398
        %v510 = vpop.f32.mrf.mxu0
        %v511 = vadd.f32 0.0, %v510
        %512 = vmatmul.f32.gmra.mxu0 %v401
        %v513 = vpop.f32.mrf.mxu0
        %v514 = vadd.f32 0.0, %v513
        %515 = vmatmul.f32.gmra.mxu0 %v404
        %v516 = vpop.f32.mrf.mxu0
        %v517 = vadd.f32 0.0, %v516
        %518 = vmatmul.f32.gmra.mxu0 %v407
        %v519 = vpop.f32.mrf.mxu0
        %v520 = vadd.f32 0.0, %v519
        %521 = vmatmul.f32.gmra.mxu0 %v410
        %v522 = vpop.f32.mrf.mxu0
        %v523 = vadd.f32 0.0, %v522
        %524 = vmatmul.f32.gmra.mxu0 %v413
        %v525 = vpop.f32.mrf.mxu0
        %v526 = vadd.f32 0.0, %v525
        %527 = vmatmul.f32.gmra.mxu0 %v416
        %v528 = vpop.f32.mrf.mxu0
        %v529 = vadd.f32 0.0, %v528
        %530 = vmatmul.f32.gmra.mxu0 %v419
        %v531 = vpop.f32.mrf.mxu0
        %v532 = vadd.f32 0.0, %v531
        %533 = vmatmul.f32.gmra.mxu0 %v422
        %v534 = vpop.f32.mrf.mxu0
        %v535 = vadd.f32 0.0, %v534
        %536 = vmatmul.f32.gmra.mxu0 %v425
        %v537 = vpop.f32.mrf.mxu0
        %v538 = vadd.f32 0.0, %v537
        %539 = vmatmul.f32.gmra.mxu0 %v428
        %v540 = vpop.f32.mrf.mxu0
        %v541 = vadd.f32 0.0, %v540
        %542 = vmatmul.f32.gmra.mxu0 %v431
        %v543 = vpop.f32.mrf.mxu0
        %v544 = vadd.f32 0.0, %v543
        %545 = vmatmul.f32.gmra.mxu0 %v434
        %v546 = vpop.f32.mrf.mxu0
        %v547 = vadd.f32 0.0, %v546
        %548 = vmatmul.f32.gmra.mxu0 %v437
        %v549 = vpop.f32.mrf.mxu0
        %v550 = vadd.f32 0.0, %v549
        %551 = vmatmul.f32.gmra.mxu0 %v440
        %v552 = vpop.f32.mrf.mxu0
        %v553 = vadd.f32 0.0, %v552
        %554 = vmatmul.f32.gmra.mxu0 %v443
        %v555 = vpop.f32.mrf.mxu0
        %v556 = vadd.f32 0.0, %v555
        %557 = vmatmul.f32.gmra.mxu0 %v446
        %v558 = vpop.f32.mrf.mxu0
        %v559 = vadd.f32 0.0, %v558
        %560 = vmatmul.f32.gmra.mxu0 %v449
        %v561 = vpop.f32.mrf.mxu0
        %v562 = vadd.f32 0.0, %v561
        %563 = vmatmul.f32.gmra.mxu0 %v452
        %v564 = vpop.f32.mrf.mxu0
        %v565 = vadd.f32 0.0, %v564
        %566 = vmatmul.f32.gmra.mxu0 %v455
        %v567 = vpop.f32.mrf.mxu0
        %v568 = vadd.f32 0.0, %v567
        %569 = vmatmul.f32.gmra.mxu0 %v458
        %v570 = vpop.f32.mrf.mxu0
        %v571 = vadd.f32 0.0, %v570
        %572 = vmatmul.f32.gmra.mxu0 %v461
        %v573 = vpop.f32.mrf.mxu0
        %v574 = vadd.f32 0.0, %v573
        %575 = vmatmul.f32.gmra.mxu0 %v464
        %v576 = vpop.f32.mrf.mxu0
        %v577 = vadd.f32 0.0, %v576
        %578 = vmatmul.f32.gmra.mxu0 %v467
        %v579 = vpop.f32.mrf.mxu0
        %v580 = vadd.f32 0.0, %v579
        %581 = vmatmul.f32.gmra.mxu0 %v470
        %v582 = vpop.f32.mrf.mxu0
        %v583 = vadd.f32 0.0, %v582
        %584 = vmatmul.f32.gmra.mxu0 %v473
        %v585 = vpop.f32.mrf.mxu0
        %v586 = vadd.f32 0.0, %v585
        %587 = vmatmul.f32.gmra.mxu0 %v476
        %v588 = vpop.f32.mrf.mxu0
        %v589 = vadd.f32 0.0, %v588
        %590 = vdwg.mxu0
        %591 = vmatpush.msra.mxu0 0.0
        %592 = vmatpush.msra.mxu0 0.0
        %593 = vmatpush.msra.mxu0 0.0
        %594 = vmatpush.msra.mxu0 0.0
        %595 = vmatpush.msra.mxu0 0.0
        %596 = vmatpush.msra.mxu0 0.0
        %597 = vmatpush.msra.mxu0 0.0
        %598 = vmatpush.msra.mxu0 0.0
        %599 = vmatpush.msra.mxu0 0.0
        %600 = vmatpush.msra.mxu0 0.0
        %601 = vmatpush.msra.mxu0 0.0
        %602 = vmatpush.msra.mxu0 0.0
        %603 = vmatpush.msra.mxu0 0.0
        %604 = vmatpush.msra.mxu0 0.0
        %605 = vmatpush.msra.mxu0 0.0
        %606 = vmatpush.msra.mxu0 %v312
        %607 = vmatmul.f32.gmra.mxu0 %v383
        %v608 = vpop.f32.mrf.mxu0
        %v609 = vadd.f32 0.0, %v608
        %610 = vmatmul.f32.gmra.mxu0 %v386
        %v611 = vpop.f32.mrf.mxu0
        %v612 = vadd.f32 0.0, %v611
        %613 = vmatmul.f32.gmra.mxu0 %v389
        %v614 = vpop.f32.mrf.mxu0
        %v615 = vadd.f32 0.0, %v614
        %616 = vmatmul.f32.gmra.mxu0 %v392
        %v617 = vpop.f32.mrf.mxu0
        %v618 = vadd.f32 0.0, %v617
        %619 = vmatmul.f32.gmra.mxu0 %v395
        %v620 = vpop.f32.mrf.mxu0
        %v621 = vadd.f32 0.0, %v620
        %622 = vmatmul.f32.gmra.mxu0 %v398
        %v623 = vpop.f32.mrf.mxu0
        %v624 = vadd.f32 0.0, %v623
        %625 = vmatmul.f32.gmra.mxu0 %v401
        %v626 = vpop.f32.mrf.mxu0
        %v627 = vadd.f32 0.0, %v626
        %628 = vmatmul.f32.gmra.mxu0 %v404
        %v629 = vpop.f32.mrf.mxu0
        %v630 = vadd.f32 0.0, %v629
        %631 = vmatmul.f32.gmra.mxu0 %v407
        %v632 = vpop.f32.mrf.mxu0
        %v633 = vadd.f32 0.0, %v632
        %634 = vmatmul.f32.gmra.mxu0 %v410
        %v635 = vpop.f32.mrf.mxu0
        %v636 = vadd.f32 0.0, %v635
        %637 = vmatmul.f32.gmra.mxu0 %v413
        %v638 = vpop.f32.mrf.mxu0
        %v639 = vadd.f32 0.0, %v638
        %640 = vmatmul.f32.gmra.mxu0 %v416
        %v641 = vpop.f32.mrf.mxu0
        %v642 = vadd.f32 0.0, %v641
        %643 = vmatmul.f32.gmra.mxu0 %v419
        %v644 = vpop.f32.mrf.mxu0
        %v645 = vadd.f32 0.0, %v644
        %646 = vmatmul.f32.gmra.mxu0 %v422
        %v647 = vpop.f32.mrf.mxu0
        %v648 = vadd.f32 0.0, %v647
        %649 = vmatmul.f32.gmra.mxu0 %v425
        %v650 = vpop.f32.mrf.mxu0
        %v651 = vadd.f32 0.0, %v650
        %652 = vmatmul.f32.gmra.mxu0 %v428
        %v653 = vpop.f32.mrf.mxu0
        %v654 = vadd.f32 0.0, %v653
        %655 = vmatmul.f32.gmra.mxu0 %v431
        %v656 = vpop.f32.mrf.mxu0
        %v657 = vadd.f32 0.0, %v656
        %658 = vmatmul.f32.gmra.mxu0 %v434
        %v659 = vpop.f32.mrf.mxu0
        %v660 = vadd.f32 0.0, %v659
        %661 = vmatmul.f32.gmra.mxu0 %v437
        %v662 = vpop.f32.mrf.mxu0
        %v663 = vadd.f32 0.0, %v662
        %664 = vmatmul.f32.gmra.mxu0 %v440
        %v665 = vpop.f32.mrf.mxu0
        %v666 = vadd.f32 0.0, %v665
        %667 = vmatmul.f32.gmra.mxu0 %v443
        %v668 = vpop.f32.mrf.mxu0
        %v669 = vadd.f32 0.0, %v668
        %670 = vmatmul.f32.gmra.mxu0 %v446
        %v671 = vpop.f32.mrf.mxu0
        %v672 = vadd.f32 0.0, %v671
        %673 = vmatmul.f32.gmra.mxu0 %v449
        %v674 = vpop.f32.mrf.mxu0
        %v675 = vadd.f32 0.0, %v674
        %676 = vmatmul.f32.gmra.mxu0 %v452
        %v677 = vpop.f32.mrf.mxu0
        %v678 = vadd.f32 0.0, %v677
        %679 = vmatmul.f32.gmra.mxu0 %v455
        %v680 = vpop.f32.mrf.mxu0
        %v681 = vadd.f32 0.0, %v680
        %682 = vmatmul.f32.gmra.mxu0 %v458
        %v683 = vpop.f32.mrf.mxu0
        %v684 = vadd.f32 0.0, %v683
        %685 = vmatmul.f32.gmra.mxu0 %v461
        %v686 = vpop.f32.mrf.mxu0
        %v687 = vadd.f32 0.0, %v686
        %688 = vmatmul.f32.gmra.mxu0 %v464
        %v689 = vpop.f32.mrf.mxu0
        %v690 = vadd.f32 0.0, %v689
        %691 = vmatmul.f32.gmra.mxu0 %v467
        %v692 = vpop.f32.mrf.mxu0
        %v693 = vadd.f32 0.0, %v692
        %694 = vmatmul.f32.gmra.mxu0 %v470
        %v695 = vpop.f32.mrf.mxu0
        %v696 = vadd.f32 0.0, %v695
        %697 = vmatmul.f32.gmra.mxu0 %v473
        %v698 = vpop.f32.mrf.mxu0
        %v699 = vadd.f32 0.0, %v698
        %700 = vmatmul.f32.gmra.mxu0 %v476
        %v701 = vpop.f32.mrf.mxu0
        %v702 = vadd.f32 0.0, %v701
        %703 = vdwg.mxu0
        %v704 = vmax.f32 %v496, %v609
        %705 = vmax.xlane.f32.xlu0 %v704
        %v706 = vpop.xlane.xlu0 %705
        %v707 = vmax.f32 %v499, %v612
        %708 = vmax.xlane.f32.xlu0 %v707
        %v709 = vpop.xlane.xlu0 %708
        %v710 = vmax.f32 %v502, %v615
        %711 = vmax.xlane.f32.xlu0 %v710
        %v712 = vpop.xlane.xlu0 %711
        %v713 = vmax.f32 %v505, %v618
        %714 = vmax.xlane.f32.xlu0 %v713
        %v715 = vpop.xlane.xlu0 %714
        %v716 = vmax.f32 %v508, %v621
        %717 = vmax.xlane.f32.xlu0 %v716
        %v718 = vpop.xlane.xlu0 %717
        %v719 = vmax.f32 %v511, %v624
        %720 = vmax.xlane.f32.xlu0 %v719
        %v721 = vpop.xlane.xlu0 %720
        %v722 = vmax.f32 %v514, %v627
        %723 = vmax.xlane.f32.xlu0 %v722
        %v724 = vpop.xlane.xlu0 %723
        %v725 = vmax.f32 %v517, %v630
        %726 = vmax.xlane.f32.xlu0 %v725
        %v727 = vpop.xlane.xlu0 %726
        %v728 = vmax.f32 %v520, %v633
        %729 = vmax.xlane.f32.xlu0 %v728
        %v730 = vpop.xlane.xlu0 %729
        %v731 = vmax.f32 %v523, %v636
        %732 = vmax.xlane.f32.xlu0 %v731
        %v733 = vpop.xlane.xlu0 %732
        %v734 = vmax.f32 %v526, %v639
        %735 = vmax.xlane.f32.xlu0 %v734
        %v736 = vpop.xlane.xlu0 %735
        %v737 = vmax.f32 %v529, %v642
        %738 = vmax.xlane.f32.xlu0 %v737
        %v739 = vpop.xlane.xlu0 %738
        %v740 = vmax.f32 %v532, %v645
        %741 = vmax.xlane.f32.xlu0 %v740
        %v742 = vpop.xlane.xlu0 %741
        %v743 = vmax.f32 %v535, %v648
        %744 = vmax.xlane.f32.xlu0 %v743
        %v745 = vpop.xlane.xlu0 %744
        %v746 = vmax.f32 %v538, %v651
        %747 = vmax.xlane.f32.xlu0 %v746
        %v748 = vpop.xlane.xlu0 %747
        %v749 = vmax.f32 %v541, %v654
        %750 = vmax.xlane.f32.xlu0 %v749
        %v751 = vpop.xlane.xlu0 %750
        %v752 = vmax.f32 %v544, %v657
        %753 = vmax.xlane.f32.xlu0 %v752
        %v754 = vpop.xlane.xlu0 %753
        %v755 = vmax.f32 %v547, %v660
        %756 = vmax.xlane.f32.xlu0 %v755
        %v757 = vpop.xlane.xlu0 %756
        %v758 = vmax.f32 %v550, %v663
        %759 = vmax.xlane.f32.xlu0 %v758
        %v760 = vpop.xlane.xlu0 %759
        %v761 = vmax.f32 %v553, %v666
        %762 = vmax.xlane.f32.xlu0 %v761
        %v763 = vpop.xlane.xlu0 %762
        %v764 = vmax.f32 %v556, %v669
        %765 = vmax.xlane.f32.xlu0 %v764
        %v766 = vpop.xlane.xlu0 %765
        %v767 = vmax.f32 %v559, %v672
        %768 = vmax.xlane.f32.xlu0 %v767
        %v769 = vpop.xlane.xlu0 %768
        %v770 = vmax.f32 %v562, %v675
        %771 = vmax.xlane.f32.xlu0 %v770
        %v772 = vpop.xlane.xlu0 %771
        %v773 = vmax.f32 %v565, %v678
        %774 = vmax.xlane.f32.xlu0 %v773
        %v775 = vpop.xlane.xlu0 %774
        %v776 = vmax.f32 %v568, %v681
        %777 = vmax.xlane.f32.xlu0 %v776
        %v778 = vpop.xlane.xlu0 %777
        %v779 = vmax.f32 %v571, %v684
        %780 = vmax.xlane.f32.xlu0 %v779
        %v781 = vpop.xlane.xlu0 %780
        %v782 = vmax.f32 %v574, %v687
        %783 = vmax.xlane.f32.xlu0 %v782
        %v784 = vpop.xlane.xlu0 %783
        %v785 = vmax.f32 %v577, %v690
        %786 = vmax.xlane.f32.xlu0 %v785
        %v787 = vpop.xlane.xlu0 %786
        %v788 = vmax.f32 %v580, %v693
        %789 = vmax.xlane.f32.xlu0 %v788
        %v790 = vpop.xlane.xlu0 %789
        %v791 = vmax.f32 %v583, %v696
        %792 = vmax.xlane.f32.xlu0 %v791
        %v793 = vpop.xlane.xlu0 %792
        %v794 = vmax.f32 %v586, %v699
        %795 = vmax.xlane.f32.xlu0 %v794
        %v796 = vpop.xlane.xlu0 %795
        %v797 = vmax.f32 %v589, %v702
        %798 = vmax.xlane.f32.xlu0 %v797
        %v799 = vpop.xlane.xlu0 %798
        %v800 = vsub.f32 %v496, %v706
        %v801 = vsub.f32 %v609, %v706
        %v802 = vsub.f32 %v499, %v709
        %v803 = vsub.f32 %v612, %v709
        %v804 = vsub.f32 %v502, %v712
        %v805 = vsub.f32 %v615, %v712
        %v806 = vsub.f32 %v505, %v715
        %v807 = vsub.f32 %v618, %v715
        %v808 = vsub.f32 %v508, %v718
        %v809 = vsub.f32 %v621, %v718
        %v810 = vsub.f32 %v511, %v721
        %v811 = vsub.f32 %v624, %v721
        %v812 = vsub.f32 %v514, %v724
        %v813 = vsub.f32 %v627, %v724
        %v814 = vsub.f32 %v517, %v727
        %v815 = vsub.f32 %v630, %v727
        %v816 = vsub.f32 %v520, %v730
        %v817 = vsub.f32 %v633, %v730
        %v818 = vsub.f32 %v523, %v733
        %v819 = vsub.f32 %v636, %v733
        %v820 = vsub.f32 %v526, %v736
        %v821 = vsub.f32 %v639, %v736
        %v822 = vsub.f32 %v529, %v739
        %v823 = vsub.f32 %v642, %v739
        %v824 = vsub.f32 %v532, %v742
        %v825 = vsub.f32 %v645, %v742
        %v826 = vsub.f32 %v535, %v745
        %v827 = vsub.f32 %v648, %v745
        %v828 = vsub.f32 %v538, %v748
        %v829 = vsub.f32 %v651, %v748
        %v830 = vsub.f32 %v541, %v751
        %v831 = vsub.f32 %v654, %v751
        %v832 = vsub.f32 %v544, %v754
        %v833 = vsub.f32 %v657, %v754
        %v834 = vsub.f32 %v547, %v757
        %v835 = vsub.f32 %v660, %v757
        %v836 = vsub.f32 %v550, %v760
        %v837 = vsub.f32 %v663, %v760
        %v838 = vsub.f32 %v553, %v763
        %v839 = vsub.f32 %v666, %v763
        %v840 = vsub.f32 %v556, %v766
        %v841 = vsub.f32 %v669, %v766
        %v842 = vsub.f32 %v559, %v769
        %v843 = vsub.f32 %v672, %v769
        %v844 = vsub.f32 %v562, %v772
        %v845 = vsub.f32 %v675, %v772
        %v846 = vsub.f32 %v565, %v775
        %v847 = vsub.f32 %v678, %v775
        %v848 = vsub.f32 %v568, %v778
        %v849 = vsub.f32 %v681, %v778
        %v850 = vsub.f32 %v571, %v781
        %v851 = vsub.f32 %v684, %v781
        %v852 = vsub.f32 %v574, %v784
        %v853 = vsub.f32 %v687, %v784
        %v854 = vsub.f32 %v577, %v787
        %v855 = vsub.f32 %v690, %v787
        %v856 = vsub.f32 %v580, %v790
        %v857 = vsub.f32 %v693, %v790
        %v858 = vsub.f32 %v583, %v793
        %v859 = vsub.f32 %v696, %v793
        %v860 = vsub.f32 %v586, %v796
        %v861 = vsub.f32 %v699, %v796
        %v862 = vsub.f32 %v589, %v799
        %v863 = vsub.f32 %v702, %v799
        %v864 = vmul.f32 %v800, 1.442695
        %v865 = vpow.pop %v864
        %v866 = vmul.f32 %v801, 1.442695
        %v867 = vpow.pop %v866
        %v868 = vmul.f32 %v802, 1.442695
        %v869 = vpow.pop %v868
        %v870 = vmul.f32 %v803, 1.442695
        %v871 = vpow.pop %v870
        %v872 = vmul.f32 %v804, 1.442695
        %v873 = vpow.pop %v872
        %v874 = vmul.f32 %v805, 1.442695
        %v875 = vpow.pop %v874
        %v876 = vmul.f32 %v806, 1.442695
        %v877 = vpow.pop %v876
        %v878 = vmul.f32 %v807, 1.442695
        %v879 = vpow.pop %v878
        %v880 = vmul.f32 %v808, 1.442695
        %v881 = vpow.pop %v880
        %v882 = vmul.f32 %v809, 1.442695
        %v883 = vpow.pop %v882
        %v884 = vmul.f32 %v810, 1.442695
        %v885 = vpow.pop %v884
        %v886 = vmul.f32 %v811, 1.442695
        %v887 = vpow.pop %v886
        %v888 = vmul.f32 %v812, 1.442695
        %v889 = vpow.pop %v888
        %v890 = vmul.f32 %v813, 1.442695
        %v891 = vpow.pop %v890
        %v892 = vmul.f32 %v814, 1.442695
        %v893 = vpow.pop %v892
        %v894 = vmul.f32 %v815, 1.442695
        %v895 = vpow.pop %v894
        %v896 = vmul.f32 %v816, 1.442695
        %v897 = vpow.pop %v896
        %v898 = vmul.f32 %v817, 1.442695
        %v899 = vpow.pop %v898
        %v900 = vmul.f32 %v818, 1.442695
        %v901 = vpow.pop %v900
        %v902 = vmul.f32 %v819, 1.442695
        %v903 = vpow.pop %v902
        %v904 = vmul.f32 %v820, 1.442695
        %v905 = vpow.pop %v904
        %v906 = vmul.f32 %v821, 1.442695
        %v907 = vpow.pop %v906
        %v908 = vmul.f32 %v822, 1.442695
        %v909 = vpow.pop %v908
        %v910 = vmul.f32 %v823, 1.442695
        %v911 = vpow.pop %v910
        %v912 = vmul.f32 %v824, 1.442695
        %v913 = vpow.pop %v912
        %v914 = vmul.f32 %v825, 1.442695
        %v915 = vpow.pop %v914
        %v916 = vmul.f32 %v826, 1.442695
        %v917 = vpow.pop %v916
        %v918 = vmul.f32 %v827, 1.442695
        %v919 = vpow.pop %v918
        %v920 = vmul.f32 %v828, 1.442695
        %v921 = vpow.pop %v920
        %v922 = vmul.f32 %v829, 1.442695
        %v923 = vpow.pop %v922
        %v924 = vmul.f32 %v830, 1.442695
        %v925 = vpow.pop %v924
        %v926 = vmul.f32 %v831, 1.442695
        %v927 = vpow.pop %v926
        %v928 = vmul.f32 %v832, 1.442695
        %v929 = vpow.pop %v928
        %v930 = vmul.f32 %v833, 1.442695
        %v931 = vpow.pop %v930
        %v932 = vmul.f32 %v834, 1.442695
        %v933 = vpow.pop %v932
        %v934 = vmul.f32 %v835, 1.442695
        %v935 = vpow.pop %v934
        %v936 = vmul.f32 %v836, 1.442695
        %v937 = vpow.pop %v936
        %v938 = vmul.f32 %v837, 1.442695
        %v939 = vpow.pop %v938
        %v940 = vmul.f32 %v838, 1.442695
        %v941 = vpow.pop %v940
        %v942 = vmul.f32 %v839, 1.442695
        %v943 = vpow.pop %v942
        %v944 = vmul.f32 %v840, 1.442695
        %v945 = vpow.pop %v944
        %v946 = vmul.f32 %v841, 1.442695
        %v947 = vpow.pop %v946
        %v948 = vmul.f32 %v842, 1.442695
        %v949 = vpow.pop %v948
        %v950 = vmul.f32 %v843, 1.442695
        %v951 = vpow.pop %v950
        %v952 = vmul.f32 %v844, 1.442695
        %v953 = vpow.pop %v952
        %v954 = vmul.f32 %v845, 1.442695
        %v955 = vpow.pop %v954
        %v956 = vmul.f32 %v846, 1.442695
        %v957 = vpow.pop %v956
        %v958 = vmul.f32 %v847, 1.442695
        %v959 = vpow.pop %v958
        %v960 = vmul.f32 %v848, 1.442695
        %v961 = vpow.pop %v960
        %v962 = vmul.f32 %v849, 1.442695
        %v963 = vpow.pop %v962
        %v964 = vmul.f32 %v850, 1.442695
        %v965 = vpow.pop %v964
        %v966 = vmul.f32 %v851, 1.442695
        %v967 = vpow.pop %v966
        %v968 = vmul.f32 %v852, 1.442695
        %v969 = vpow.pop %v968
        %v970 = vmul.f32 %v853, 1.442695
        %v971 = vpow.pop %v970
        %v972 = vmul.f32 %v854, 1.442695
        %v973 = vpow.pop %v972
        %v974 = vmul.f32 %v855, 1.442695
        %v975 = vpow.pop %v974
        %v976 = vmul.f32 %v856, 1.442695
        %v977 = vpow.pop %v976
        %v978 = vmul.f32 %v857, 1.442695
        %v979 = vpow.pop %v978
        %v980 = vmul.f32 %v858, 1.442695
        %v981 = vpow.pop %v980
        %v982 = vmul.f32 %v859, 1.442695
        %v983 = vpow.pop %v982
        %v984 = vmul.f32 %v860, 1.442695
        %v985 = vpow.pop %v984
        %v986 = vmul.f32 %v861, 1.442695
        %v987 = vpow.pop %v986
        %v988 = vmul.f32 %v862, 1.442695
        %v989 = vpow.pop %v988
        %v990 = vmul.f32 %v863, 1.442695
        %v991 = vpow.pop %v990
        %v992 = vpack.c.bf16 %v869, %v865
        %v993 = vpack.c.bf16 %v871, %v867
        %v994 = vpack.c.bf16 %v877, %v873
        %v995 = vpack.c.bf16 %v879, %v875
        %v996 = vpack.c.bf16 %v885, %v881
        %v997 = vpack.c.bf16 %v887, %v883
        %v998 = vpack.c.bf16 %v893, %v889
        %v999 = vpack.c.bf16 %v895, %v891
        %v1000 = vpack.c.bf16 %v901, %v897
        %v1001 = vpack.c.bf16 %v903, %v899
        %v1002 = vpack.c.bf16 %v909, %v905
        %v1003 = vpack.c.bf16 %v911, %v907
        %v1004 = vpack.c.bf16 %v917, %v913
        %v1005 = vpack.c.bf16 %v919, %v915
        %v1006 = vpack.c.bf16 %v925, %v921
        %v1007 = vpack.c.bf16 %v927, %v923
        %v1008 = vpack.c.bf16 %v933, %v929
        %v1009 = vpack.c.bf16 %v935, %v931
        %v1010 = vpack.c.bf16 %v941, %v937
        %v1011 = vpack.c.bf16 %v943, %v939
        %v1012 = vpack.c.bf16 %v949, %v945
        %v1013 = vpack.c.bf16 %v951, %v947
        %v1014 = vpack.c.bf16 %v957, %v953
        %v1015 = vpack.c.bf16 %v959, %v955
        %v1016 = vpack.c.bf16 %v965, %v961
        %v1017 = vpack.c.bf16 %v967, %v963
        %v1018 = vpack.c.bf16 %v973, %v969
        %v1019 = vpack.c.bf16 %v975, %v971
        %v1020 = vpack.c.bf16 %v981, %v977
        %v1021 = vpack.c.bf16 %v983, %v979
        %v1022 = vpack.c.bf16 %v989, %v985
        %v1023 = vpack.c.bf16 %v991, %v987
        %v1024 = vpack.c.bf16 %v315, %v289
        %v1026 = vunpack.c.l.b16 %v1024
        %v1027 = vunpack.c.h.b16 %v1024
        %v1028 = vpack.c.b16 %v1026, %v1026
        %v1029 = vpack.c.b16 %v1027, %v1027
        %v1032 = vsel %vm260, %v1028, 1065369472
        %v1035 = vsel %vm260, %v1029, 1065369472
        %1037 = vmatpush.bf16.xpose.msra.mxu0 %v1006
        %1038 = vmatpush.bf16.xpose.msra.mxu0 %v1004
        %1039 = vmatpush.bf16.xpose.msra.mxu0 %v1002
        %1040 = vmatpush.bf16.xpose.msra.mxu0 %v1000
        %1041 = vmatpush.bf16.xpose.msra.mxu0 %v998
        %1042 = vmatpush.bf16.xpose.msra.mxu0 %v996
        %1043 = vmatpush.bf16.xpose.msra.mxu0 %v994
        %1044 = vmatpush.bf16.xpose.msra.mxu0 %v992
        %1045 = vmatmul.bf16.gmra.mxu0 %v1032
        %v1046 = vpop.f32.mrf.mxu0
        %v1047 = vadd.f32 0.0, %v1046
        %v1048 = vpop.f32.mrf.mxu0
        %v1049 = vadd.f32 0.0, %v1048
        %1050 = vdwg.mxu0
        %1051 = vmatpush.bf16.xpose.msra.mxu0 %v1007
        %1052 = vmatpush.bf16.xpose.msra.mxu0 %v1005
        %1053 = vmatpush.bf16.xpose.msra.mxu0 %v1003
        %1054 = vmatpush.bf16.xpose.msra.mxu0 %v1001
        %1055 = vmatpush.bf16.xpose.msra.mxu0 %v999
        %1056 = vmatpush.bf16.xpose.msra.mxu0 %v997
        %1057 = vmatpush.bf16.xpose.msra.mxu0 %v995
        %1058 = vmatpush.bf16.xpose.msra.mxu0 %v993
        %1059 = vmatmul.bf16.gmra.mxu0 %v1035
        %v1060 = vpop.f32.mrf.mxu0
        %v1061 = vadd.f32 %v1047, %v1060
        %v1062 = vpop.f32.mrf.mxu0
        %v1063 = vadd.f32 %v1049, %v1062
        %1064 = vdwg.mxu0
        %1065 = vmatpush.bf16.xpose.msra.mxu0 %v1022
        %1066 = vmatpush.bf16.xpose.msra.mxu0 %v1020
        %1067 = vmatpush.bf16.xpose.msra.mxu0 %v1018
        %1068 = vmatpush.bf16.xpose.msra.mxu0 %v1016
        %1069 = vmatpush.bf16.xpose.msra.mxu0 %v1014
        %1070 = vmatpush.bf16.xpose.msra.mxu0 %v1012
        %1071 = vmatpush.bf16.xpose.msra.mxu0 %v1010
        %1072 = vmatpush.bf16.xpose.msra.mxu0 %v1008
        %1073 = vmatmul.bf16.gmra.mxu0 %v1032
        %v1074 = vpop.f32.mrf.mxu0
        %v1075 = vadd.f32 0.0, %v1074
        %v1076 = vpop.f32.mrf.mxu0
        %v1077 = vadd.f32 0.0, %v1076
        %1078 = vdwg.mxu0
        %1079 = vmatpush.bf16.xpose.msra.mxu0 %v1023
        %1080 = vmatpush.bf16.xpose.msra.mxu0 %v1021
        %1081 = vmatpush.bf16.xpose.msra.mxu0 %v1019
        %1082 = vmatpush.bf16.xpose.msra.mxu0 %v1017
        %1083 = vmatpush.bf16.xpose.msra.mxu0 %v1015
        %1084 = vmatpush.bf16.xpose.msra.mxu0 %v1013
        %1085 = vmatpush.bf16.xpose.msra.mxu0 %v1011
        %1086 = vmatpush.bf16.xpose.msra.mxu0 %v1009
        %1087 = vmatmul.bf16.gmra.mxu0 %v1035
        %v1088 = vpop.f32.mrf.mxu0
        %v1089 = vadd.f32 %v1075, %v1088
        %v1090 = vpop.f32.mrf.mxu0
        %v1091 = vadd.f32 %v1077, %v1090
        %1092 = vdwg.mxu0
        %v1093 = vrcp.pop %v1063
        %v1094 = vmul.f32 %v1063, %v1093
        %v1095 = vsub.f32 1.0, %v1094
        %v1096 = vmul.f32 %v1093, %v1095
        %v1097 = vadd.f32 %v1093, %v1096
        %vm1098 = vweird.f32 %v1063
        %vm1099 = vweird.f32 %v1093
        %vm1100 = vmor %vm1098, %vm1099
        %v1101 = vsel %vm1100, %v1093, %v1097
        %v1102 = vand.u32 2147483647, %v1063
        %vm1103 = vcmp.eq.f32.partialorder %v1102, 8.507059e+37
        %v1104 = vand.u32 %v1063, 2147483648
        %v1105 = vor.u32 1.1754944e-38, %v1104
        %v1106 = vsel %vm1103, %v1105, %v1101
        %v1107 = vrcp.pop %v1091
        %v1108 = vmul.f32 %v1091, %v1107
        %v1109 = vsub.f32 1.0, %v1108
        %v1110 = vmul.f32 %v1107, %v1109
        %v1111 = vadd.f32 %v1107, %v1110
        %vm1112 = vweird.f32 %v1091
        %vm1113 = vweird.f32 %v1107
        %vm1114 = vmor %vm1112, %vm1113
        %v1115 = vsel %vm1114, %v1107, %v1111
        %v1116 = vand.u32 2147483647, %v1091
        %vm1117 = vcmp.eq.f32.partialorder %v1116, 8.507059e+37
        %v1118 = vand.u32 %v1091, 2147483648
        %v1119 = vor.u32 1.1754944e-38, %v1118
        %v1120 = vsel %vm1117, %v1119, %v1115
        %v1121 = vperm.slane %v1106, 0
        %v1122 = vperm.slane %v1120, 0
        %v1123 = vmul.f32 %v1061, %v1121
        %v1124 = vmul.f32 %v1089, %v1122
        %v1125 = vld [vmem:[%s3] sm:$0xf]
        %v1126 = vld [vmem:[%s4] sm:$0xf]
        %1128 = vset.pattern.permute.xlu0 0
        %1129 = vperm.xlu0 %1128, %v1126
        %v1130 = vpop.permute.xlu0 %1129
        %v1133 = vsel %vm381, %v1125, 0
        %1135 = vmatpush.msra.mxu0 0.0
        %1136 = vmatpush.msra.mxu0 0.0
        %1137 = vmatpush.msra.mxu0 0.0
        %1138 = vmatpush.msra.mxu0 0.0
        %1139 = vmatpush.msra.mxu0 0.0
        %1140 = vmatpush.msra.mxu0 0.0
        %1141 = vmatpush.msra.mxu0 0.0
        %1142 = vmatpush.msra.mxu0 0.0
        %1143 = vmatpush.msra.mxu0 0.0
        %1144 = vmatpush.msra.mxu0 0.0
        %1145 = vmatpush.msra.mxu0 0.0
        %1146 = vmatpush.msra.mxu0 0.0
        %1147 = vmatpush.msra.mxu0 0.0
        %1148 = vmatpush.msra.mxu0 0.0
        %1149 = vmatpush.msra.mxu0 0.0
        %1150 = vmatpush.msra.mxu0 %v1123
        %1151 = vmatmul.f32.gmra.mxu0 %v1133
        %v1152 = vpop.f32.mrf.mxu0
        %v1153 = vadd.f32 %v1130, %v1152
        %1154 = vdwg.mxu0
        %1155 = vmatpush.msra.mxu0 0.0
        %1156 = vmatpush.msra.mxu0 0.0
        %1157 = vmatpush.msra.mxu0 0.0
        %1158 = vmatpush.msra.mxu0 0.0
        %1159 = vmatpush.msra.mxu0 0.0
        %1160 = vmatpush.msra.mxu0 0.0
        %1161 = vmatpush.msra.mxu0 0.0
        %1162 = vmatpush.msra.mxu0 0.0
        %1163 = vmatpush.msra.mxu0 0.0
        %1164 = vmatpush.msra.mxu0 0.0
        %1165 = vmatpush.msra.mxu0 0.0
        %1166 = vmatpush.msra.mxu0 0.0
        %1167 = vmatpush.msra.mxu0 0.0
        %1168 = vmatpush.msra.mxu0 0.0
        %1169 = vmatpush.msra.mxu0 0.0
        %1170 = vmatpush.msra.mxu0 %v1124
        %1171 = vmatmul.f32.gmra.mxu0 %v1133
        %v1172 = vpop.f32.mrf.mxu0
        %v1173 = vadd.f32 %v1130, %v1172
        %1174 = vdwg.mxu0
        %v1177 = vrot.slane %v1173, 4
        %v1178 = vsel %vm260, %v1153, %v1177
        %v1180 = vadd.f32 %v224, %v1178
        %1181 = vst [vmem:[%s217] sm:$0xff] %v1180
        %s1182 = sand.u32 %s137, 1
        %s1183 = scalar_lea.sflag [#allocation3], %s1182
        %s1184 = sand.u32 %s137, 1
        %s1185 = smul.addr %s1184, 8
        %s1186 = scalar_lea.vmem [#allocation2], %s1185
        // Predicated region
        $region41: #{tpu_custom_call.1} parent=39 // pred_check
          %p1187 = pneg %p147
        $region42: #{tpu_custom_call.1} parent=39 // pred_check_branch
          %1189 = sbr.rel (%p1187) target = $region44
        $region43: #{tpu_custom_call.1} parent=39 // pred_region
          %1191 = vsyncadd %s1183, 0
          %s1192 = smul.addr %s19, 2
          %s1193 = smul.addr %s1192, 4
          %s1194 = scalar_lea.hbm %s5, %s1193
          %s1196 = sshll.u32 %s1186, 4
          %s1197 = int_to_ptr.vmem [resolvable:$true] %s1196
          %s1198 = sshll.u32 %s1194, 4
          %s1199 = int_to_ptr.hbm [resolvable:$true] %s1198
          %1201 = dma.vmem_to_hbm [thread:$0]  %s1197, 128, %s1199, %s1183
        $region44: #{tpu_custom_call.1} parent=39 // pred_fallthru
          _
      $region40: #{tpu_custom_call.1} parent=5 // pred_fallthru
        _
      %p1202 = scmp.le.s32.totalorder 2, %s14
      // Predicated region
      $region45: #{tpu_custom_call.1} parent=5 // pred_check
        %p1203 = pneg %p1202
      $region46: #{tpu_custom_call.1} parent=5 // pred_check_branch
        %1205 = sbr.rel (%p1203) target = $region48
      $region47: #{tpu_custom_call.1} parent=5 // pred_region
        %s1206 = ssub.s32 %s14, 2
        // Predicated region
        $region49: #{tpu_custom_call.1} parent=47 // pred_check
          %p1207 = pneg %p153
        $region50: #{tpu_custom_call.1} parent=47 // pred_check_branch
          %1209 = sbr.rel (%p1207) target = $region52
        $region51: #{tpu_custom_call.1} parent=47 // pred_region
          %s1210 = sand.u32 %s138, 1
          %s1211 = scalar_lea.sflag [#allocation3], %s1210
          %s1212 = sand.u32 %s138, 1
          %s1213 = smul.addr %s1212, 8
          %s1214 = scalar_lea.vmem [#allocation2], %s1213
          %1216 = dma.done %s1211, 128
        $region52: #{tpu_custom_call.1} parent=47 // pred_fallthru
          _
      $region48: #{tpu_custom_call.1} parent=5 // pred_fallthru
        _
    $region6: #{tpu_custom_call.1} parent=1 // loop_footer
      %s18 = sadd.s32 1, %s14
    $region7: #{tpu_custom_call.1} parent=1 // loop_footer_branch
      %13 = sbr.rel target = $region3
    $region8: #{tpu_custom_call.1} parent=1 // loop_exit
      _
    %1217 = vsyncpa [#allocation3], 1
    %s1218 = scalar_lea.sflag [#allocation3], 1
    %1219 = vsyncpa %s1218, 1

</llo_original>
